<compile_context>
chip_gen: v6e
topology: v6e:2x2x1
jax: 0.10.0
libtpu: 0.0.40
codegen_flags: <defaults>
</compile_context>

<pallas_src>
import functools
import math

import jax
import jax.numpy as jnp
from jax import lax
from jax.experimental import pallas as pl
from jax.experimental.pallas import tpu as pltpu

_INV_SQRT2 = 1.0 / math.sqrt(2.0)


def _round_up(x, m):
    return ((x + m - 1) // m) * m


def _cdiv(a, b):
    return -(-a // b)


# --------------------------------------------------------------------------
# Activation
# --------------------------------------------------------------------------
def _activation(h, gelu_activation, approx_gelu):
    if not gelu_activation:
        return jnp.maximum(h, 0.0)
    if approx_gelu:
        # tanh approximation lands on the EUP (idle slot while the MXU streams);
        # opt-in because it is not bit-identical to the erf reference.
        return jax.nn.gelu(h, approximate=True)
    # Exact erf GELU: bit-for-bit parity with the PyTorch reference.
    return 0.5 * h * (1.0 + lax.erf(h * _INV_SQRT2))


# --------------------------------------------------------------------------
# Kernels
# --------------------------------------------------------------------------
def _ffn_kernel_single(x_ref, w1_ref, b1_ref, w2_ref, b2_ref, o_ref, *,
                       gelu_activation, approx_gelu):
    """Whole hidden dim resident (n_h == 1): no accumulator round trip."""
    h = jnp.dot(x_ref[...], w1_ref[...], preferred_element_type=jnp.float32)
    h = h + b1_ref[...].astype(jnp.float32)
    h = _activation(h, gelu_activation, approx_gelu)
    # TODO(synk): optional bf16 bias-add/activation on v6e/v7x (bf16 VALU) would
    # halve the elementwise work; kept f32 for parity with the reference.
    y = jnp.dot(h.astype(w2_ref.dtype), w2_ref[...],
                preferred_element_type=jnp.float32)
    # dropout: F.dropout(p, training=False) -> identity (inference semantics)
    o_ref[...] = (y + b2_ref[...].astype(jnp.float32)).astype(o_ref.dtype)


def _ffn_kernel_multi(x_ref, w1_ref, b1_ref, w2_ref, b2_ref, o_ref, acc_ref, *,
                      gelu_activation, approx_gelu):
    """Hidden dim split into slabs (reduction axis last), f32 VMEM accumulator."""
    h_idx = pl.program_id(1)

    @pl.when(h_idx == 0)
    def _init():
        acc_ref[...] = jnp.zeros_like(acc_ref)

    h = jnp.dot(x_ref[...], w1_ref[...], preferred_element_type=jnp.float32)
    h = h + b1_ref[...].astype(jnp.float32)
    h = _activation(h, gelu_activation, approx_gelu)
    acc_ref[...] += jnp.dot(h.astype(w2_ref.dtype), w2_ref[...],
                            preferred_element_type=jnp.float32)

    @pl.when(h_idx == pl.num_programs(1) - 1)
    def _finalize():
        o_ref[...] = (acc_ref[...] + b2_ref[...].astype(jnp.float32)
                      ).astype(o_ref.dtype)


# --------------------------------------------------------------------------
# Device-aware tile selection
# --------------------------------------------------------------------------
def _device_vmem_bytes():
    try:
        return int(pltpu.get_tpu_info().vmem_capacity_bytes)
    except Exception:
        # Hardware query unavailable (e.g. old runtime): assume the most
        # VMEM-constrained generation (v7x, 64 MiB per TensorCore).
        return 64 << 20


def _default_tile_m():
    try:
        kind = jax.devices()[0].device_kind.lower()
    except Exception:
        kind = ""
    if "v7" in kind:
        return 512    # 64 MiB VMEM, ~3.2 TB/s HBM -> ~300-400 FLOP/B crossover
    if "v6" in kind:
        return 1024   # 918 TF/s vs ~1.4 TB/s -> needs ~650 FLOP/B weight reuse
    if "v5" in kind and ("lite" in kind or "5e" in kind):
        return 256    # v5e crossover ~240 FLOP/B; 256 rows already amortizes
    return 512


def _vmem_footprint(tile_m, tile_h, n_h, in_dim, out_dim, x_isz, w_isz, o_isz):
    f = 2 * (in_dim * tile_h + tile_h * out_dim) * w_isz   # W1/W2 slabs (2 bufs)
    f += 2 * (tile_h + out_dim) * w_isz                    # biases
    f += 2 * tile_m * in_dim * x_isz                       # x tiles (double buf)
    f += 2 * tile_m * out_dim * o_isz                      # out tiles (double buf)
    f += tile_m * tile_h * 4                               # f32 intermediate
    if n_h > 1:
        f += tile_m * out_dim * 4                          # f32 accumulator
    return f


def _tile_h_candidates(hidden):
    if hidden % 128 != 0:
        return [hidden]
    # Prefer multiples of 256 so the 256x256 MXUs on v6e/v7x are fully filled;
    # 128-wide slabs only when the hidden dim forces it (fine on v5e's 4x128 MXU).
    gran = 256 if hidden % 256 == 0 else 128
    cands = [d for d in range(hidden, gran - 1, -gran) if hidden % d == 0]
    if not cands or cands[0] != hidden:
        cands.insert(0, hidden)
    return cands


def _choose_tiles(M, in_dim, hidden, out_dim, x_isz, w_isz, o_isz,
                  tile_m, tile_h, vmem_budget):
    tile_m = max(8, min(_round_up(int(tile_m), 8), _round_up(M, 8)))

    if tile_h is not None:
        if tile_h >= hidden:
            return tile_m, hidden
        if hidden % tile_h != 0 or tile_h % 128 != 0:
            raise ValueError("tile_h must divide hidden and be a multiple of 128")
        return tile_m, tile_h

    cands = _tile_h_candidates(hidden)
    tm = tile_m
    while True:
        for th in cands:
            if _vmem_footprint(tm, th, hidden // th, in_dim, out_dim,
                               x_isz, w_isz, o_isz) <= vmem_budget:
                return tm, th
        if tm <= 64:
            break
        tm = max(64, _round_up(tm // 2, 8))
    # Best effort: smallest slab + smallest tile_m considered.
    return tm, cands[-1]


# --------------------------------------------------------------------------
# Wrapper
# --------------------------------------------------------------------------
def transformer_ffn(x, w1, b1, w2, b2, *, gelu_activation=True,
                    approx_gelu=False, tile_m=None, tile_h=None):
    """x: (..., in_dim). Weights stored as (in_dim, hidden), (hidden, out_dim).

    tile_m: rows (tokens) per grid step (default: device-generation aware).
    tile_h: hidden-axis slab (multiple of 128 dividing hidden); None picks the
            largest slab that fits the device VMEM budget.
    """
    in_dim = x.shape[-1]
    hidden = w1.shape[1]
    out_dim = w2.shape[1]

    lead_shape = x.shape[:-1]
    x2d = x.reshape(-1, in_dim)
    M = x2d.shape[0]

    x_isz = jnp.dtype(x.dtype).itemsize
    w_isz = jnp.dtype(w1.dtype).itemsize
    o_isz = x_isz

    device_vmem = _device_vmem_bytes()
    if tile_m is None:
        tile_m = _default_tile_m()
    tile_m, tile_h = _choose_tiles(M, in_dim, hidden, out_dim,
                                   x_isz, w_isz, o_isz,
                                   tile_m, tile_h,
                                   vmem_budget=int(0.6 * device_vmem))
    n_h = hidden // tile_h
    grid_m = _cdiv(M, tile_m)          # ragged last block handled by Pallas
    m_eff = grid_m * tile_m

    b1_2d = b1.reshape(1, hidden)
    b2_2d = b2.reshape(1, out_dim)

    # ---- advisory cost estimate (counts per-M-tile weight re-reads) ---------
    cost = pl.CostEstimate(
        flops=int(2 * m_eff * hidden * (in_dim + out_dim)),
        transcendentals=int(m_eff * hidden) if gelu_activation else 0,
        bytes_accessed=int((M * in_dim + M * out_dim) * x_isz
                           + grid_m * (w1.size + w2.size + b1.size + b2.size) * w_isz),
    )

    # ---- VMEM limit clamped to the device's real capacity -------------------
    footprint = _vmem_footprint(tile_m, tile_h, n_h, in_dim, out_dim,
                                x_isz, w_isz, o_isz)
    vmem_limit = int(footprint * 1.25) + (2 << 20)
    vmem_limit = max(vmem_limit, 16 << 20)
    vmem_limit = min(vmem_limit, device_vmem - (8 << 20))

    out_shape = jax.ShapeDtypeStruct((M, out_dim), x.dtype)

    if n_h == 1:
        # Specialized single-slab path: weights fully resident, direct store.
        kernel = functools.partial(_ffn_kernel_single,
                                   gelu_activation=gelu_activation,
                                   approx_gelu=approx_gelu)
        grid_spec = pltpu.PrefetchScalarGridSpec(
            num_scalar_prefetch=0,
            grid=(grid_m,),
            in_specs=[
                pl.BlockSpec((tile_m, in_dim), lambda i: (i, 0)),
                pl.BlockSpec((in_dim, hidden), lambda i: (0, 0)),
                pl.BlockSpec((1, hidden), lambda i: (0, 0)),
                pl.BlockSpec((hidden, out_dim), lambda i: (0, 0)),
                pl.BlockSpec((1, out_dim), lambda i: (0, 0)),
            ],
            out_specs=pl.BlockSpec((tile_m, out_dim), lambda i: (i, 0)),
        )
        dim_sem = ("parallel",)
    else:
        kernel = functools.partial(_ffn_kernel_multi,
                                   gelu_activation=gelu_activation,
                                   approx_gelu=approx_gelu)
        grid_spec = pltpu.PrefetchScalarGridSpec(
            num_scalar_prefetch=0,
            grid=(grid_m, n_h),
            in_specs=[
                pl.BlockSpec((tile_m, in_dim), lambda i, h: (i, 0)),
                pl.BlockSpec((in_dim, tile_h), lambda i, h: (0, h)),
                pl.BlockSpec((1, tile_h), lambda i, h: (0, h)),
                pl.BlockSpec((tile_h, out_dim), lambda i, h: (h, 0)),
                pl.BlockSpec((1, out_dim), lambda i, h: (0, 0)),
            ],
            out_specs=pl.BlockSpec((tile_m, out_dim), lambda i, h: (i, 0)),
            scratch_shapes=[pltpu.VMEM((tile_m, out_dim), jnp.float32)],
        )
        dim_sem = ("parallel", "arbitrary")

    # TODO(synk): on v7x, consider pltpu.CORE_PARALLEL on the M axis (or an
    # explicit core_map split) to guarantee both TensorCores are used.
    out2d = pl.pallas_call(
        kernel,
        out_shape=out_shape,
        grid_spec=grid_spec,
        compiler_params=pltpu.CompilerParams(
            dimension_semantics=dim_sem,
            vmem_limit_bytes=vmem_limit,
        ),
        cost_estimate=cost,
    )(x2d, w1, b1_2d, w2, b2_2d)

    return out2d.reshape(*lead_shape, out_dim)


# --------------------------------------------------------------------------
# Deterministic parameter init (PyTorch nn.Linear default: U(-1/sqrt(fan_in), ..))
# --------------------------------------------------------------------------
def init_params(key, in_dim, dim_hidden, out_dim, dtype=jnp.float32):
    k1, k2, k3, k4 = jax.random.split(key, 4)
    bound1 = 1.0 / math.sqrt(in_dim)
    bound2 = 1.0 / math.sqrt(dim_hidden)
    # store weights as (in_features, out_features) so x @ W matches x @ W_pt.T
    w1 = jax.random.uniform(k1, (in_dim, dim_hidden), dtype, -bound1, bound1)
    b1 = jax.random.uniform(k2, (dim_hidden,), dtype, -bound1, bound1)
    w2 = jax.random.uniform(k3, (dim_hidden, out_dim), dtype, -bound2, bound2)
    b2 = jax.random.uniform(k4, (out_dim,), dtype, -bound2, bound2)
    return w1, b1, w2, b2


def _reference_ffn(x, w1, b1, w2, b2, gelu_activation=True):
    h = x @ w1 + b1
    if gelu_activation:
        h = 0.5 * h * (1.0 + lax.erf(h / jnp.sqrt(2.0)))
    else:
        h = jnp.maximum(h, 0.0)
    return h @ w2 + b2


if __name__ == "__main__":
    # Small lane-aligned shapes consistent with the module: (batch, seq, in_dim)
    batch, seq = 2, 8
    in_dim, dim_hidden, out_dim = 128, 256, 128
    dropout = 0.1            # inference: dropout is identity
    gelu_activation = True

    key = jax.random.PRNGKey(0)
    kx, kp = jax.random.split(key)
    x = jax.random.normal(kx, (batch, seq, in_dim), jnp.float32)
    w1, b1, w2, b2 = init_params(kp, in_dim, dim_hidden, out_dim)
    y_ref = _reference_ffn(x, w1, b1, w2, b2, True)

    # 1) GELU, hidden axis split in two slabs -> exercises the f32 accumulator path.
    y = transformer_ffn(x, w1, b1, w2, b2, gelu_activation=True, tile_h=128)
    y = jax.block_until_ready(y)
    assert y.shape == (batch, seq, out_dim)
    assert jnp.allclose(y, y_ref, atol=2e-4, rtol=2e-4), "GELU/tiled-hidden mismatch"

    # 2) ReLU, weights fully resident -> specialized single-slab path (no acc).
    y2 = transformer_ffn(x, w1, b1, w2, b2, gelu_activation=False)
    y2 = jax.block_until_ready(y2)
    y2_ref = _reference_ffn(x, w1, b1, w2, b2, False)
    assert jnp.allclose(y2, y2_ref, atol=2e-4, rtol=2e-4), "ReLU mismatch"

    # 3) bf16 operands: native-dtype MXU matmuls with f32 accumulation.
    xb = x.astype(jnp.bfloat16)
    w1b, b1b, w2b, b2b = (a.astype(jnp.bfloat16) for a in (w1, b1, w2, b2))
    yb = transformer_ffn(xb, w1b, b1b, w2b, b2b, gelu_activation=True)
    yb = jax.block_until_ready(yb)
    assert jnp.allclose(yb.astype(jnp.float32), y_ref, atol=1e-1, rtol=1e-1), \
        "bf16 mismatch"

    # 4) Ragged M (no wrapper padding): M=10 tokens, tile_m=8 -> partial last block,
    #    combined with the multi-slab accumulator path.
    xr = jax.random.normal(jax.random.PRNGKey(3), (2, 5, in_dim), jnp.float32)
    yr = transformer_ffn(xr, w1, b1, w2, b2, gelu_activation=True,
                         tile_m=8, tile_h=128)
    yr = jax.block_until_ready(yr)
    yr_ref = _reference_ffn(xr, w1, b1, w2, b2, True)
    assert yr.shape == (2, 5, out_dim)
    assert jnp.allclose(yr, yr_ref, atol=2e-4, rtol=2e-4), "ragged-M mismatch"

    print("KERNEL_OK")
</pallas_src>

<mosaic_0001>
module attributes {stable_mosaic.version = 11 : i64} {
  func.func @_ffn_kernel_multi(%arg0: i32, %arg1: i32, %arg2: memref<16x128xf32, #tpu.memory_space<vmem>>, %arg3: memref<128x128xf32, #tpu.memory_space<vmem>>, %arg4: memref<1x128xf32, #tpu.memory_space<vmem>>, %arg5: memref<128x128xf32, #tpu.memory_space<vmem>>, %arg6: memref<1x128xf32, #tpu.memory_space<vmem>>, %arg7: memref<16x128xf32, #tpu.memory_space<vmem>>, %arg8: memref<16x128xf32, #tpu.memory_space<vmem>>) attributes {dimension_semantics = [#tpu.dimension_semantics<parallel>, #tpu.dimension_semantics<arbitrary>], iteration_bounds = array<i64: 1, 2>, scalar_prefetch = 0 : i64, scratch_operands = 1 : i64, tpu.core_type = #tpu.core_type<tc>, window_params = [{transform_indices = @transform_0, window_bounds = array<i64: 16, 128>}, {transform_indices = @transform_1, window_bounds = array<i64: 128, 128>}, {transform_indices = @transform_2, window_bounds = array<i64: 1, 128>}, {transform_indices = @transform_3, window_bounds = array<i64: 128, 128>}, {pipeline_mode = #tpu.pipeline_mode<synchronous>, transform_indices = @transform_4, window_bounds = array<i64: 1, 128>}, {transform_indices = @transform_5, window_bounds = array<i64: 16, 128>}]} {
    %c0_i32 = arith.constant 0 : i32
    %0 = arith.cmpi eq, %arg1, %c0_i32 : i32
    %1 = arith.extui %0 : i1 to i32
    %c0_i32_0 = arith.constant 0 : i32
    %2 = arith.cmpi ne, %1, %c0_i32_0 : i32
    scf.if %2 {
      %cst_17 = arith.constant 0.000000e+00 : f32
      %25 = vector.broadcast %cst_17 : f32 to vector<16x128xf32>
      %c0_18 = arith.constant 0 : index
      %c0_19 = arith.constant 0 : index
      %26 = vector.load %arg8[%c0_18, %c0_19] : memref<16x128xf32, #tpu.memory_space<vmem>>, vector<16x128xf32>
      tpu.vector_store %arg8[%c0_18, %c0_19], %25 {strides = array<i32>} : memref<16x128xf32, #tpu.memory_space<vmem>>, vector<16x128xf32>,
    } else {
    }
    %c0 = arith.constant 0 : index
    %c0_1 = arith.constant 0 : index
    %3 = vector.load %arg2[%c0, %c0_1] : memref<16x128xf32, #tpu.memory_space<vmem>>, vector<16x128xf32>
    %c0_2 = arith.constant 0 : index
    %c0_3 = arith.constant 0 : index
    %4 = vector.load %arg3[%c0_2, %c0_3] : memref<128x128xf32, #tpu.memory_space<vmem>>, vector<128x128xf32>
    %cst = arith.constant dense<0.000000e+00> : vector<16x128xf32>
    %5 = tpu.matmul %3, %4, %cst {dimension_numbers = #tpu.dot_dimension_numbers<[1], [0], [0], [1], [0, 0, 1, 1], [], []>} : vector<16x128xf32>, vector<128x128xf32>, vector<16x128xf32> -> vector<16x128xf32>
    %c0_4 = arith.constant 0 : index
    %c0_5 = arith.constant 0 : index
    %6 = vector.load %arg4[%c0_4, %c0_5] : memref<1x128xf32, #tpu.memory_space<vmem>>, vector<1x128xf32>
    %7 = vector.broadcast %6 : vector<1x128xf32> to vector<16x128xf32>
    %8 = arith.addf %5, %7 : vector<16x128xf32>
    %cst_6 = arith.constant 5.000000e-01 : f32
    %9 = vector.broadcast %cst_6 : f32 to vector<16x128xf32>
    %10 = arith.mulf %9, %8 : vector<16x128xf32>
    %cst_7 = arith.constant 0.707106769 : f32
    %11 = vector.broadcast %cst_7 : f32 to vector<16x128xf32>
    %12 = arith.mulf %8, %11 : vector<16x128xf32>
    %13 = math.erf %12 : vector<16x128xf32>
    %cst_8 = arith.constant 1.000000e+00 : f32
    %14 = vector.broadcast %cst_8 : f32 to vector<16x128xf32>
    %15 = arith.addf %14, %13 : vector<16x128xf32>
    %16 = arith.mulf %10, %15 : vector<16x128xf32>
    %c0_9 = arith.constant 0 : index
    %c0_10 = arith.constant 0 : index
    %17 = vector.load %arg8[%c0_9, %c0_10] : memref<16x128xf32, #tpu.memory_space<vmem>>, vector<16x128xf32>
    %c0_11 = arith.constant 0 : index
    %c0_12 = arith.constant 0 : index
    %18 = vector.load %arg5[%c0_11, %c0_12] : memref<128x128xf32, #tpu.memory_space<vmem>>, vector<128x128xf32>
    %cst_13 = arith.constant dense<0.000000e+00> : vector<16x128xf32>
    %19 = tpu.matmul %16, %18, %cst_13 {dimension_numbers = #tpu.dot_dimension_numbers<[1], [0], [0], [1], [0, 0, 1, 1], [], []>} : vector<16x128xf32>, vector<128x128xf32>, vector<16x128xf32> -> vector<16x128xf32>
    %20 = arith.addf %17, %19 : vector<16x128xf32>
    %c0_14 = arith.constant 0 : index
    %c0_15 = arith.constant 0 : index
    %21 = vector.load %arg8[%c0_14, %c0_15] : memref<16x128xf32, #tpu.memory_space<vmem>>, vector<16x128xf32>
    tpu.vector_store %arg8[%c0_14, %c0_15], %20 {strides = array<i32>} : memref<16x128xf32, #tpu.memory_space<vmem>>, vector<16x128xf32>,
    %c1_i32 = arith.constant 1 : i32
    %22 = arith.cmpi eq, %arg1, %c1_i32 : i32
    %23 = arith.extui %22 : i1 to i32
    %c0_i32_16 = arith.constant 0 : i32
    %24 = arith.cmpi ne, %23, %c0_i32_16 : i32
    scf.if %24 {
      %c0_17 = arith.constant 0 : index
      %c0_18 = arith.constant 0 : index
      %25 = vector.load %arg8[%c0_17, %c0_18] : memref<16x128xf32, #tpu.memory_space<vmem>>, vector<16x128xf32>
      %c0_19 = arith.constant 0 : index
      %c0_20 = arith.constant 0 : index
      %26 = vector.load %arg6[%c0_19, %c0_20] : memref<1x128xf32, #tpu.memory_space<vmem>>, vector<1x128xf32>
      %27 = vector.broadcast %26 : vector<1x128xf32> to vector<16x128xf32>
      %28 = arith.addf %25, %27 : vector<16x128xf32>
      %c0_21 = arith.constant 0 : index
      %c0_22 = arith.constant 0 : index
      %29 = vector.load %arg7[%c0_21, %c0_22] : memref<16x128xf32, #tpu.memory_space<vmem>>, vector<16x128xf32>
      tpu.vector_store %arg7[%c0_21, %c0_22], %28 {strides = array<i32>} : memref<16x128xf32, #tpu.memory_space<vmem>>, vector<16x128xf32>,
    } else {
    }
    return
  }
  func.func @transform_0(%arg0: i32, %arg1: i32) -> (i32, i32) {
    %c0_i32 = arith.constant 0 : i32
    %c0_i32_0 = arith.constant 0 : i32
    return %arg0, %c0_i32 : i32, i32
  }
  func.func @transform_1(%arg0: i32, %arg1: i32) -> (i32, i32) {
    %c0_i32 = arith.constant 0 : i32
    %c0_i32_0 = arith.constant 0 : i32
    return %c0_i32, %arg1 : i32, i32
  }
  func.func @transform_2(%arg0: i32, %arg1: i32) -> (i32, i32) {
    %c0_i32 = arith.constant 0 : i32
    %c0_i32_0 = arith.constant 0 : i32
    return %c0_i32, %arg1 : i32, i32
  }
  func.func @transform_3(%arg0: i32, %arg1: i32) -> (i32, i32) {
    %c0_i32 = arith.constant 0 : i32
    %c0_i32_0 = arith.constant 0 : i32
    return %arg1, %c0_i32 : i32, i32
  }
  func.func @transform_4(%arg0: i32, %arg1: i32) -> (i32, i32) {
    %c0_i32 = arith.constant 0 : i32
    %c0_i32_0 = arith.constant 0 : i32
    %c0_i32_1 = arith.constant 0 : i32
    return %c0_i32, %c0_i32_0 : i32, i32
  }
  func.func @transform_5(%arg0: i32, %arg1: i32) -> (i32, i32) {
    %c0_i32 = arith.constant 0 : i32
    %c0_i32_0 = arith.constant 0 : i32
    return %arg0, %c0_i32 : i32, i32
  }
}

</mosaic_0001>

<llo_original>
// kernel: tpu_custom_call.1
$region0: #{tpu_custom_call.1}
  #allocation0 [shape = 'u32[]', space=smem, size = 0x4, offset = 0x4, fixed_abs, tag = 'smem constant byte address 0x4 - core index']
  #allocation1 [shape = 'u32[144,128]{1,0:T(1,128)}', space=vmem, size = 0x12000, scoped, tag = 'internal scratch']
  #allocation2 [shape = 'f32[16,128]{1,0:T(8,128)}', space=vmem, size = 0x2000, scoped, tag = 'scratch operand']
  %s0 = inlined_call_operand.hbm [shape: f32[16,128], index: 0, kind: input, shape index: {}]
  %s1 = inlined_call_operand.hbm [shape: f32[128,256], index: 1, kind: input, shape index: {}]
  %s2 = inlined_call_operand.vmem [shape: f32[1,256], index: 2, kind: input, shape index: {}]
  %s3 = inlined_call_operand.hbm [shape: f32[256,128], index: 3, kind: input, shape index: {}]
  %s4 = inlined_call_operand.vmem [shape: f32[1,128], index: 4, kind: input, shape index: {}]
  %s5 = inlined_call_operand.hbm [shape: f32[16,128], index: 5, kind: output, shape index: {}]
  %s6 = sld [smem:[#allocation0]]
  $region73: #{tpu_custom_call.1} parent=0
    _
  %s8 = ssub.s32 1, %s6
  %s9 = scalar_select 0, %s8, %s6
  $region1: #{tpu_custom_call.1} parent=0
    #allocation3 [shape = 'u8[8192]{0}', space=vmem, size = 0x2000, scoped, tag = 'input window, operand 0, single buffered']
    #allocation4 [shape = 's32[2]{0}', space=sflag, size = 0x8, scoped, tag = 'scoped memory for tpu_custom_call.1']
    #allocation5 [shape = 's32[2]{0}', space=sflag, size = 0x8, scoped, tag = 'scoped memory for tpu_custom_call.1']
    #allocation6 [shape = 'u8[131072]{0}', space=vmem, size = 0x20000, scoped, tag = 'input window, operand 1']
    #allocation7 [shape = 's32[2]{0}', space=sflag, size = 0x8, scoped, tag = 'scoped memory for tpu_custom_call.1']
    #allocation8 [shape = 'u8[131072]{0}', space=vmem, size = 0x20000, scoped, tag = 'input window, operand 3']
    #allocation9 [shape = 'u8[8192]{0}', space=vmem, size = 0x2000, scoped, tag = 'output window, operand 0, single buffered']
    %10 = vsyncpa [#allocation4], 0
    %11 = vsyncpa [#allocation7], 0
    %s12 = scalar_lea.sflag [#allocation7], 1
    %13 = vsyncpa %s12, 0
    %14 = vsyncpa [#allocation5], 0
    loop: start=0, step=1, limit=4
    $region2: #{tpu_custom_call.1} parent=1 // loop_pre_header
      _
    $region3: #{tpu_custom_call.1} parent=1 // loop_header
      %s16 = sphi 0, %s20
      %p17 = scmp.ge.s32.totalorder %s16, 4
      %s23 = sphi 0, %s35
      %s24 = sphi 0, %s31
      %s25 = sphi 0, %s23
      %s26 = sphi 0, %s24
      %s27 = sphi 0, %s25
      %s28 = sphi 0, %s26
      %s38 = sphi 0, %s40
      %s41 = sphi 0, %s38
      %s42 = sphi 0, %s41
      %s58 = sphi 0, %s42
      %s64 = sphi 0, %s66
      %s67 = sphi 0, %s64
      %s68 = sphi 0, %s67
      %s84 = sphi 0, %s68
      %s90 = sphi 0, %s92
      %s93 = sphi 0, %s90
      %s94 = sphi 0, %s93
      %s110 = sphi 0, %s94
      %s116 = sphi 0, %s118
      %s119 = sphi 0, %s116
      %s120 = sphi 0, %s119
      %s136 = sphi 0, %s120
      %s140 = sphi 0, %s140
      %s142 = sphi 0, %s140
      %s143 = sphi 0, %s142
      %s157 = sphi 0, %s143
      %s163 = sphi 0, %s165
      %s166 = sphi 0, %s163
      %s167 = sphi 0, %s166
      %s183 = sphi 0, %s167
    $region4: #{tpu_custom_call.1} parent=1 // loop_header_branch
      %19 = sbr.rel (%p17) target = $region8
    $region5: #{tpu_custom_call.1} parent=1 // loop_body
      %s21 = ssub.s32 %s16, 1
      %s22 = ssub.s32 %s16, 2
      %s29 = sadd.s32 1, %s24
      %p30 = scmp.ge.s32.totalorder %s29, 2
      %s31 = scalar_select %p30, 0, %s29
      %s32 = sadd.s32 1, %s23
      %s33 = scalar_select %p30, %s32, %s23
      %p34 = scmp.ge.s32.totalorder %s33, 1
      %s35 = scalar_select %p34, 0, %s33
      %s36 = ssub.s32 %s23, %s35
      %p37 = scmp.eq.s32.totalorder %s36, 0
      %s39 = sadd.s32 %s38, 1
      %s40 = scalar_select %p37, %s38, %s39
      %p43 = pneg %p37
      %p44 = scmp.eq.s32.totalorder %s16, 1
      %p45 = por %p43, %p44
      %p46 = scmp.ne.s32.totalorder %s38, %s41
      %p47 = scmp.eq.s32.totalorder %s16, 0
      %p48 = por %p46, %p47
      %p49 = scmp.ne.s32.totalorder %s38, %s41
      %p50 = scmp.eq.s32.totalorder %s21, 1
      %p51 = por %p49, %p50
      %p52 = scmp.ne.s32.totalorder %s41, %s42
      %p53 = scmp.eq.s32.totalorder %s21, 0
      %p54 = por %p52, %p53
      %p55 = scmp.ne.s32.totalorder %s41, %s42
      %p56 = scmp.eq.s32.totalorder %s22, 1
      %p57 = por %p55, %p56
      %p59 = scmp.ne.s32.totalorder %s42, %s58
      %p60 = scmp.eq.s32.totalorder %s22, 0
      %p61 = por %p59, %p60
      %s62 = ssub.s32 %s24, %s31
      %p63 = scmp.eq.s32.totalorder %s62, 0
      %s65 = sadd.s32 %s64, 1
      %s66 = scalar_select %p63, %s64, %s65
      %p69 = pneg %p63
      %p70 = scmp.eq.s32.totalorder %s16, 1
      %p71 = por %p69, %p70
      %p72 = scmp.ne.s32.totalorder %s64, %s67
      %p73 = scmp.eq.s32.totalorder %s16, 0
      %p74 = por %p72, %p73
      %p75 = scmp.ne.s32.totalorder %s64, %s67
      %p76 = scmp.eq.s32.totalorder %s21, 1
      %p77 = por %p75, %p76
      %p78 = scmp.ne.s32.totalorder %s67, %s68
      %p79 = scmp.eq.s32.totalorder %s21, 0
      %p80 = por %p78, %p79
      %p81 = scmp.ne.s32.totalorder %s67, %s68
      %p82 = scmp.eq.s32.totalorder %s22, 1
      %p83 = por %p81, %p82
      %p85 = scmp.ne.s32.totalorder %s68, %s84
      %p86 = scmp.eq.s32.totalorder %s22, 0
      %p87 = por %p85, %p86
      %s88 = ssub.s32 %s24, %s31
      %p89 = scmp.eq.s32.totalorder %s88, 0
      %s91 = sadd.s32 %s90, 1
      %s92 = scalar_select %p89, %s90, %s91
      %p95 = pneg %p89
      %p96 = scmp.eq.s32.totalorder %s16, 1
      %p97 = por %p95, %p96
      %p98 = scmp.ne.s32.totalorder %s90, %s93
      %p99 = scmp.eq.s32.totalorder %s16, 0
      %p100 = por %p98, %p99
      %p101 = scmp.ne.s32.totalorder %s90, %s93
      %p102 = scmp.eq.s32.totalorder %s21, 1
      %p103 = por %p101, %p102
      %p104 = scmp.ne.s32.totalorder %s93, %s94
      %p105 = scmp.eq.s32.totalorder %s21, 0
      %p106 = por %p104, %p105
      %p107 = scmp.ne.s32.totalorder %s93, %s94
      %p108 = scmp.eq.s32.totalorder %s22, 1
      %p109 = por %p107, %p108
      %p111 = scmp.ne.s32.totalorder %s94, %s110
      %p112 = scmp.eq.s32.totalorder %s22, 0
      %p113 = por %p111, %p112
      %s114 = ssub.s32 %s24, %s31
      %p115 = scmp.eq.s32.totalorder %s114, 0
      %s117 = sadd.s32 %s116, 1
      %s118 = scalar_select %p115, %s116, %s117
      %p121 = pneg %p115
      %p122 = scmp.eq.s32.totalorder %s16, 1
      %p123 = por %p121, %p122
      %p124 = scmp.ne.s32.totalorder %s116, %s119
      %p125 = scmp.eq.s32.totalorder %s16, 0
      %p126 = por %p124, %p125
      %p127 = scmp.ne.s32.totalorder %s116, %s119
      %p128 = scmp.eq.s32.totalorder %s21, 1
      %p129 = por %p127, %p128
      %p130 = scmp.ne.s32.totalorder %s119, %s120
      %p131 = scmp.eq.s32.totalorder %s21, 0
      %p132 = por %p130, %p131
      %p133 = scmp.ne.s32.totalorder %s119, %s120
      %p134 = scmp.eq.s32.totalorder %s22, 1
      %p135 = por %p133, %p134
      %p137 = scmp.ne.s32.totalorder %s120, %s136
      %p138 = scmp.eq.s32.totalorder %s22, 0
      %p139 = por %p137, %p138
      %s141 = sadd.s32 %s140, 1
      %p144 = scmp.eq.s32.totalorder %s16, 1
      %p145 = scmp.ne.s32.totalorder %s140, %s142
      %p146 = scmp.eq.s32.totalorder %s16, 0
      %p147 = por %p145, %p146
      %p148 = scmp.ne.s32.totalorder %s140, %s142
      %p149 = scmp.eq.s32.totalorder %s21, 1
      %p150 = por %p148, %p149
      %p151 = scmp.ne.s32.totalorder %s142, %s143
      %p152 = scmp.eq.s32.totalorder %s21, 0
      %p153 = por %p151, %p152
      %p154 = scmp.ne.s32.totalorder %s142, %s143
      %p155 = scmp.eq.s32.totalorder %s22, 1
      %p156 = por %p154, %p155
      %p158 = scmp.ne.s32.totalorder %s143, %s157
      %p159 = scmp.eq.s32.totalorder %s22, 0
      %p160 = por %p158, %p159
      %s161 = ssub.s32 %s23, %s35
      %p162 = scmp.eq.s32.totalorder %s161, 0
      %s164 = sadd.s32 %s163, 1
      %s165 = scalar_select %p162, %s163, %s164
      %p168 = pneg %p162
      %p169 = scmp.eq.s32.totalorder %s16, 1
      %p170 = por %p168, %p169
      %p171 = scmp.ne.s32.totalorder %s163, %s166
      %p172 = scmp.eq.s32.totalorder %s16, 0
      %p173 = por %p171, %p172
      %p174 = scmp.ne.s32.totalorder %s163, %s166
      %p175 = scmp.eq.s32.totalorder %s21, 1
      %p176 = por %p174, %p175
      %p177 = scmp.ne.s32.totalorder %s166, %s167
      %p178 = scmp.eq.s32.totalorder %s21, 0
      %p179 = por %p177, %p178
      %p180 = scmp.ne.s32.totalorder %s166, %s167
      %p181 = scmp.eq.s32.totalorder %s22, 1
      %p182 = por %p180, %p181
      %p184 = scmp.ne.s32.totalorder %s167, %s183
      %p185 = scmp.eq.s32.totalorder %s22, 0
      %p186 = por %p184, %p185
      %p187 = scmp.le.s32.totalorder 1, %s16
      %p188 = scmp.lt.s32.totalorder %s16, 3
      %p189 = pnand %p187, %p188
      %p190 = pneg %p189
      // Predicated region
      $region9: #{tpu_custom_call.1} parent=5 // pred_check
        _
      $region10: #{tpu_custom_call.1} parent=5 // pred_check_branch
        %192 = sbr.rel (%p189) target = $region12
      $region11: #{tpu_custom_call.1} parent=5 // pred_region
        %s193 = ssub.s32 %s16, 1
        // Predicated region
        $region13: #{tpu_custom_call.1} parent=11 // pred_check
          %p194 = pneg %p54
        $region14: #{tpu_custom_call.1} parent=11 // pred_check_branch
          %196 = sbr.rel (%p194) target = $region16
        $region15: #{tpu_custom_call.1} parent=11 // pred_region
          %s197 = smul.u32 2, %s25
          %s199 = ssub.s32 256, 256
          %200 = vsyncadd [#allocation4], %s199
          %s201 = smul.addr %s197, 128
          %s202 = scalar_lea.hbm %s0, %s201
          %s203 = sshll.u32 [#allocation3], 4
          %s204 = int_to_ptr.vmem [resolvable:$true] %s203
          %209 = dma.hbm_to_vmem [thread:$0]  %s202, 256, %s204, [#allocation4], 128, 128, 8
        $region16: #{tpu_custom_call.1} parent=11 // pred_fallthru
          _
        // Predicated region
        $region17: #{tpu_custom_call.1} parent=11 // pred_check
          %p210 = pneg %p153
        $region18: #{tpu_custom_call.1} parent=11 // pred_check_branch
          %212 = sbr.rel (%p210) target = $region20
        $region19: #{tpu_custom_call.1} parent=11 // pred_region
          _
        $region20: #{tpu_custom_call.1} parent=11 // pred_fallthru
          _
      $region12: #{tpu_custom_call.1} parent=5 // pred_fallthru
        _
      %p213 = scmp.lt.s32.totalorder %s16, 2
      // Predicated region
      $region21: #{tpu_custom_call.1} parent=5 // pred_check
        %p214 = pneg %p213
      $region22: #{tpu_custom_call.1} parent=5 // pred_check_branch
        %216 = sbr.rel (%p214) target = $region24
      $region23: #{tpu_custom_call.1} parent=5 // pred_region
        // Predicated region
        $region25: #{tpu_custom_call.1} parent=23 // pred_check
          %p217 = pneg %p74
        $region26: #{tpu_custom_call.1} parent=23 // pred_check_branch
          %219 = sbr.rel (%p217) target = $region28
        $region27: #{tpu_custom_call.1} parent=23 // pred_region
          %s220 = sand.u32 %s16, 1
          %s221 = scalar_lea.sflag [#allocation7], %s220
          %s222 = sand.u32 %s64, 1
          %s223 = smul.addr %s222, 128
          %s224 = scalar_lea.vmem [#allocation6], %s223
          %s226 = ssub.s32 2048, 2048
          %227 = vsyncadd %s221, %s226
          %s228 = smul.addr %s24, 128
          %s229 = scalar_lea.hbm %s1, %s228
          %s230 = sshll.u32 %s224, 4
          %s231 = int_to_ptr.vmem [resolvable:$true] %s230
          %236 = dma.hbm_to_vmem [thread:$0]  %s229, 2048, %s231, %s221, 256, 128, 8
        $region28: #{tpu_custom_call.1} parent=23 // pred_fallthru
          _
        // Predicated region
        $region29: #{tpu_custom_call.1} parent=23 // pred_check
          %p237 = pneg %p100
        $region30: #{tpu_custom_call.1} parent=23 // pred_check_branch
          %239 = sbr.rel (%p237) target = $region32
        $region31: #{tpu_custom_call.1} parent=23 // pred_region
          %p240 = scmp.lt.s32.totalorder %s24, 1
          %s241 = scalar_select %p240, %s24, 1
          %s242 = scalar_lea.vmem %s2, %s241
        $region32: #{tpu_custom_call.1} parent=23 // pred_fallthru
          _
        // Predicated region
        $region33: #{tpu_custom_call.1} parent=23 // pred_check
          %p243 = pneg %p126
        $region34: #{tpu_custom_call.1} parent=23 // pred_check_branch
          %245 = sbr.rel (%p243) target = $region36
        $region35: #{tpu_custom_call.1} parent=23 // pred_region
          %s246 = sand.u32 %s16, 1
          %s247 = scalar_lea.sflag [#allocation7], %s246
          %s248 = sand.u32 %s116, 1
          %s249 = smul.addr %s248, 128
          %s250 = scalar_lea.vmem [#allocation8], %s249
          %s251 = smul.u32 16, %s24
          %s253 = ssub.s32 2048, 2048
          %254 = vsyncadd %s247, %s253
          %s255 = smul.addr %s251, 128
          %s256 = scalar_lea.hbm %s3, %s255
          %s257 = sshll.u32 %s250, 4
          %s258 = int_to_ptr.vmem [resolvable:$true] %s257
          %263 = dma.hbm_to_vmem [thread:$0]  %s256, 2048, %s258, %s247, 128, 128, 8
        $region36: #{tpu_custom_call.1} parent=23 // pred_fallthru
          _
      $region24: #{tpu_custom_call.1} parent=5 // pred_fallthru
        _
      %p264 = scmp.le.s32.totalorder 1, %s16
      %p265 = scmp.lt.s32.totalorder %s16, 3
      %p266 = pnand %p264, %p265
      %p267 = pneg %p266
      // Predicated region
      $region37: #{tpu_custom_call.1} parent=5 // pred_check
        _
      $region38: #{tpu_custom_call.1} parent=5 // pred_check_branch
        %269 = sbr.rel (%p266) target = $region40
      $region39: #{tpu_custom_call.1} parent=5 // pred_region
        %s270 = ssub.s32 %s16, 1
        // Predicated region
        $region41: #{tpu_custom_call.1} parent=39 // pred_check
          %p271 = pneg %p54
        $region42: #{tpu_custom_call.1} parent=39 // pred_check_branch
          %273 = sbr.rel (%p271) target = $region44
        $region43: #{tpu_custom_call.1} parent=39 // pred_region
          %274 = dma.done [#allocation4], 256
        $region44: #{tpu_custom_call.1} parent=39 // pred_fallthru
          _
        %s275 = sand.u32 %s21, 1
        %s276 = scalar_lea.sflag [#allocation7], %s275
        %s277 = sand.u32 %s67, 1
        %s278 = smul.addr %s277, 128
        %s279 = scalar_lea.vmem [#allocation6], %s278
        // Predicated region
        $region45: #{tpu_custom_call.1} parent=39 // pred_check
          %p280 = pneg %p80
        $region46: #{tpu_custom_call.1} parent=39 // pred_check_branch
          %282 = sbr.rel (%p280) target = $region48
        $region47: #{tpu_custom_call.1} parent=39 // pred_region
          %283 = dma.done %s276, 2048
        $region48: #{tpu_custom_call.1} parent=39 // pred_fallthru
          _
        %s284 = sand.u32 %s21, 1
        %s285 = scalar_lea.sflag [#allocation7], %s284
        %s286 = sand.u32 %s119, 1
        %s287 = smul.addr %s286, 128
        %s288 = scalar_lea.vmem [#allocation8], %s287
        // Predicated region
        $region49: #{tpu_custom_call.1} parent=39 // pred_check
          %p289 = pneg %p132
        $region50: #{tpu_custom_call.1} parent=39 // pred_check_branch
          %291 = sbr.rel (%p289) target = $region52
        $region51: #{tpu_custom_call.1} parent=39 // pred_region
          %292 = dma.done %s285, 2048
        $region52: #{tpu_custom_call.1} parent=39 // pred_fallthru
          _
        %p293 = pneg %p54
        %p294 = pneg %p51
        %s295 = sand.u32 %s21, 1
        %s296 = scalar_lea.sflag [#allocation7], %s295
        %s297 = sand.u32 %s67, 1
        %s298 = smul.addr %s297, 128
        %s299 = scalar_lea.vmem [#allocation6], %s298
        %p300 = pneg %p80
        %p301 = pneg %p77
        %p302 = scmp.lt.s32.totalorder %s26, 1
        %s303 = scalar_select %p302, %s26, 1
        %s304 = scalar_lea.vmem %s2, %s303
        %p305 = pneg %p106
        %p306 = pneg %p103
        %s307 = sand.u32 %s21, 1
        %s308 = scalar_lea.sflag [#allocation7], %s307
        %s309 = sand.u32 %s119, 1
        %s310 = smul.addr %s309, 128
        %s311 = scalar_lea.vmem [#allocation8], %s310
        %p312 = pneg %p132
        %p313 = pneg %p129
        %p314 = pneg %p153
        %p315 = pneg %p150
        %p316 = pneg %p179
        %p317 = pneg %p176
        %s318 = smul.u32 2, %s25
        %p319 = scmp.lt.s32.totalorder %s26, 1
        %s320 = scalar_select %p319, %s26, 1
        %s321 = scalar_lea.vmem %s2, %s320
        %s322 = smul.u32 16, %s26
        %s323 = smul.u32 2, %s25
        %p324 = scmp.eq.s32.totalorder %s26, 0
        // Predicated region
        $region53: #{tpu_custom_call.1} parent=39 // pred_check
          %p325 = pneg %p324
        $region54: #{tpu_custom_call.1} parent=39 // pred_check_branch
          %327 = sbr.rel (%p325) target = $region56
        $region55: #{tpu_custom_call.1} parent=39 // pred_region
          %328 = vst [vmem:[#allocation2] sm:$0xff] 0.0
          %329 = vst [vmem:[#allocation2 + $0x8] sm:$0xff] 0.0
        $region56: #{tpu_custom_call.1} parent=39 // pred_fallthru
          _
        %v330 = vld [vmem:[#allocation3] sm:$0xff]
        %v331 = vld [vmem:[#allocation3 + $0x8] sm:$0xff]
        %v332 = vld [vmem:[%s279] sm:$0xff]
        %v333 = vld [vmem:[%s279 + $0x8] sm:$0xff]
        %v334 = vld [vmem:[%s279 + $0x10] sm:$0xff]
        %v335 = vld [vmem:[%s279 + $0x18] sm:$0xff]
        %v336 = vld [vmem:[%s279 + $0x20] sm:$0xff]
        %v337 = vld [vmem:[%s279 + $0x28] sm:$0xff]
        %v338 = vld [vmem:[%s279 + $0x30] sm:$0xff]
        %v339 = vld [vmem:[%s279 + $0x38] sm:$0xff]
        %v340 = vld [vmem:[%s279 + $0x40] sm:$0xff]
        %v341 = vld [vmem:[%s279 + $0x48] sm:$0xff]
        %v342 = vld [vmem:[%s279 + $0x50] sm:$0xff]
        %v343 = vld [vmem:[%s279 + $0x58] sm:$0xff]
        %v344 = vld [vmem:[%s279 + $0x60] sm:$0xff]
        %v345 = vld [vmem:[%s279 + $0x68] sm:$0xff]
        %v346 = vld [vmem:[%s279 + $0x70] sm:$0xff]
        %v347 = vld [vmem:[%s279 + $0x78] sm:$0xff]
        %v348 = vld [vmem:[%s321] sm:$0x1]
        %v350 = vlaneseq
        %v351 = vshrl.u32 %v350, 7
        %v352 = vsub.s32 0, %v351
        %v353 = vrot.slane %v348, %v352
        %355 = vmatprep.subr.mxu0 0.0
        %356 = vmatpush1.msra.mxu0 %v347
        %357 = vmatprep.subr.mxu0 0.0
        %358 = vmatpush1.msra.mxu0 %v346
        %359 = vmatprep.subr.mxu0 0.0
        %360 = vmatpush1.msra.mxu0 %v345
        %361 = vmatprep.subr.mxu0 0.0
        %362 = vmatpush1.msra.mxu0 %v344
        %363 = vmatprep.subr.mxu0 0.0
        %364 = vmatpush1.msra.mxu0 %v343
        %365 = vmatprep.subr.mxu0 0.0
        %366 = vmatpush1.msra.mxu0 %v342
        %367 = vmatprep.subr.mxu0 0.0
        %368 = vmatpush1.msra.mxu0 %v341
        %369 = vmatprep.subr.mxu0 0.0
        %370 = vmatpush1.msra.mxu0 %v340
        %371 = vmatprep.subr.mxu0 0.0
        %372 = vmatpush1.msra.mxu0 %v339
        %373 = vmatprep.subr.mxu0 0.0
        %374 = vmatpush1.msra.mxu0 %v338
        %375 = vmatprep.subr.mxu0 0.0
        %376 = vmatpush1.msra.mxu0 %v337
        %377 = vmatprep.subr.mxu0 0.0
        %378 = vmatpush1.msra.mxu0 %v336
        %379 = vmatprep.subr.mxu0 0.0
        %380 = vmatpush1.msra.mxu0 %v335
        %381 = vmatprep.subr.mxu0 0.0
        %382 = vmatpush1.msra.mxu0 %v334
        %383 = vmatprep.subr.mxu0 0.0
        %384 = vmatpush1.msra.mxu0 %v333
        %385 = vmatprep.subr.mxu0 0.0
        %386 = vmatpush1.msra.mxu0 %v332
        %387 = vmatprep.subr.mxu0 0.0
        %388 = vmatpush2.msra.mxu0 0.0
        %389 = vmatprep.subr.mxu0 0.0
        %390 = vmatpush2.msra.mxu0 0.0
        %391 = vmatprep.subr.mxu0 0.0
        %392 = vmatpush2.msra.mxu0 0.0
        %393 = vmatprep.subr.mxu0 0.0
        %394 = vmatpush2.msra.mxu0 0.0
        %395 = vmatprep.subr.mxu0 0.0
        %396 = vmatpush2.msra.mxu0 0.0
        %397 = vmatprep.subr.mxu0 0.0
        %398 = vmatpush2.msra.mxu0 0.0
        %399 = vmatprep.subr.mxu0 0.0
        %400 = vmatpush2.msra.mxu0 0.0
        %401 = vmatprep.subr.mxu0 0.0
        %402 = vmatpush2.msra.mxu0 0.0
        %403 = vmatprep.subr.mxu0 0.0
        %404 = vmatpush2.msra.mxu0 0.0
        %405 = vmatprep.subr.mxu0 0.0
        %406 = vmatpush2.msra.mxu0 0.0
        %407 = vmatprep.subr.mxu0 0.0
        %408 = vmatpush2.msra.mxu0 0.0
        %409 = vmatprep.subr.mxu0 0.0
        %410 = vmatpush2.msra.mxu0 0.0
        %411 = vmatprep.subr.mxu0 0.0
        %412 = vmatpush2.msra.mxu0 0.0
        %413 = vmatprep.subr.mxu0 0.0
        %414 = vmatpush2.msra.mxu0 0.0
        %415 = vmatprep.subr.mxu0 0.0
        %416 = vmatpush2.msra.mxu0 0.0
        %417 = vmatprep.subr.mxu0 0.0
        %418 = vmatpush2.msra.mxu0 0.0
        %419 = vmatprep.mubr.f32.mxu0 0.0
        %420 = vmatmul.mubr.f32.gmra.mxu0 %v330
        %v421 = vpop.f32.mrf.mxu0
        %v422 = vadd.f32 %v353, %v421
        %v423 = vpop.f32.mrf.mxu0
        %424 = vmatprep.mubr.f32.mxu0 0.0
        %425 = vmatmul.mubr.f32.gmra.mxu0 %v331
        %v426 = vpop.f32.mrf.mxu0
        %v427 = vadd.f32 %v353, %v426
        %v428 = vpop.f32.mrf.mxu0
        %429 = vdwg.mxu0
        %v430 = vmul.f32 %v422, 0.5
        %v431 = vmul.f32 %v427, 0.5
        %v432 = vmul.f32 %v422, 0.70710677
        %v433 = vmul.f32 %v427, 0.70710677
        %v434 = verf.f32.pop %v432
        %v435 = verf.f32.pop %v433
        %v436 = vadd.f32 %v434, 1.0
        %v437 = vadd.f32 %v435, 1.0
        %v438 = vmul.f32 %v430, %v436
        %v439 = vmul.f32 %v431, %v437
        %v440 = vld [vmem:[#allocation2] sm:$0xff]
        %v441 = vld [vmem:[#allocation2 + $0x8] sm:$0xff]
        %v442 = vld [vmem:[%s288] sm:$0xff]
        %v443 = vld [vmem:[%s288 + $0x8] sm:$0xff]
        %v444 = vld [vmem:[%s288 + $0x10] sm:$0xff]
        %v445 = vld [vmem:[%s288 + $0x18] sm:$0xff]
        %v446 = vld [vmem:[%s288 + $0x20] sm:$0xff]
        %v447 = vld [vmem:[%s288 + $0x28] sm:$0xff]
        %v448 = vld [vmem:[%s288 + $0x30] sm:$0xff]
        %v449 = vld [vmem:[%s288 + $0x38] sm:$0xff]
        %v450 = vld [vmem:[%s288 + $0x40] sm:$0xff]
        %v451 = vld [vmem:[%s288 + $0x48] sm:$0xff]
        %v452 = vld [vmem:[%s288 + $0x50] sm:$0xff]
        %v453 = vld [vmem:[%s288 + $0x58] sm:$0xff]
        %v454 = vld [vmem:[%s288 + $0x60] sm:$0xff]
        %v455 = vld [vmem:[%s288 + $0x68] sm:$0xff]
        %v456 = vld [vmem:[%s288 + $0x70] sm:$0xff]
        %v457 = vld [vmem:[%s288 + $0x78] sm:$0xff]
        %458 = vmatprep.subr.mxu0 0.0
        %459 = vmatpush1.msra.mxu0 %v457
        %460 = vmatprep.subr.mxu0 0.0
        %461 = vmatpush1.msra.mxu0 %v456
        %462 = vmatprep.subr.mxu0 0.0
        %463 = vmatpush1.msra.mxu0 %v455
        %464 = vmatprep.subr.mxu0 0.0
        %465 = vmatpush1.msra.mxu0 %v454
        %466 = vmatprep.subr.mxu0 0.0
        %467 = vmatpush1.msra.mxu0 %v453
        %468 = vmatprep.subr.mxu0 0.0
        %469 = vmatpush1.msra.mxu0 %v452
        %470 = vmatprep.subr.mxu0 0.0
        %471 = vmatpush1.msra.mxu0 %v451
        %472 = vmatprep.subr.mxu0 0.0
        %473 = vmatpush1.msra.mxu0 %v450
        %474 = vmatprep.subr.mxu0 0.0
        %475 = vmatpush1.msra.mxu0 %v449
        %476 = vmatprep.subr.mxu0 0.0
        %477 = vmatpush1.msra.mxu0 %v448
        %478 = vmatprep.subr.mxu0 0.0
        %479 = vmatpush1.msra.mxu0 %v447
        %480 = vmatprep.subr.mxu0 0.0
        %481 = vmatpush1.msra.mxu0 %v446
        %482 = vmatprep.subr.mxu0 0.0
        %483 = vmatpush1.msra.mxu0 %v445
        %484 = vmatprep.subr.mxu0 0.0
        %485 = vmatpush1.msra.mxu0 %v444
        %486 = vmatprep.subr.mxu0 0.0
        %487 = vmatpush1.msra.mxu0 %v443
        %488 = vmatprep.subr.mxu0 0.0
        %489 = vmatpush1.msra.mxu0 %v442
        %490 = vmatprep.subr.mxu0 0.0
        %491 = vmatpush2.msra.mxu0 0.0
        %492 = vmatprep.subr.mxu0 0.0
        %493 = vmatpush2.msra.mxu0 0.0
        %494 = vmatprep.subr.mxu0 0.0
        %495 = vmatpush2.msra.mxu0 0.0
        %496 = vmatprep.subr.mxu0 0.0
        %497 = vmatpush2.msra.mxu0 0.0
        %498 = vmatprep.subr.mxu0 0.0
        %499 = vmatpush2.msra.mxu0 0.0
        %500 = vmatprep.subr.mxu0 0.0
        %501 = vmatpush2.msra.mxu0 0.0
        %502 = vmatprep.subr.mxu0 0.0
        %503 = vmatpush2.msra.mxu0 0.0
        %504 = vmatprep.subr.mxu0 0.0
        %505 = vmatpush2.msra.mxu0 0.0
        %506 = vmatprep.subr.mxu0 0.0
        %507 = vmatpush2.msra.mxu0 0.0
        %508 = vmatprep.subr.mxu0 0.0
        %509 = vmatpush2.msra.mxu0 0.0
        %510 = vmatprep.subr.mxu0 0.0
        %511 = vmatpush2.msra.mxu0 0.0
        %512 = vmatprep.subr.mxu0 0.0
        %513 = vmatpush2.msra.mxu0 0.0
        %514 = vmatprep.subr.mxu0 0.0
        %515 = vmatpush2.msra.mxu0 0.0
        %516 = vmatprep.subr.mxu0 0.0
        %517 = vmatpush2.msra.mxu0 0.0
        %518 = vmatprep.subr.mxu0 0.0
        %519 = vmatpush2.msra.mxu0 0.0
        %520 = vmatprep.subr.mxu0 0.0
        %521 = vmatpush2.msra.mxu0 0.0
        %522 = vmatprep.mubr.f32.mxu0 0.0
        %523 = vmatmul.mubr.f32.gmra.mxu0 %v438
        %v524 = vpop.f32.mrf.mxu0
        %v525 = vadd.f32 0.0, %v524
        %v526 = vpop.f32.mrf.mxu0
        %527 = vmatprep.mubr.f32.mxu0 0.0
        %528 = vmatmul.mubr.f32.gmra.mxu0 %v439
        %v529 = vpop.f32.mrf.mxu0
        %v530 = vadd.f32 0.0, %v529
        %v531 = vpop.f32.mrf.mxu0
        %532 = vdwg.mxu0
        %v533 = vadd.f32 %v440, %v525
        %v534 = vadd.f32 %v441, %v530
        %535 = vst [vmem:[#allocation2] sm:$0xff] %v533
        %536 = vst [vmem:[#allocation2 + $0x8] sm:$0xff] %v534
        %p537 = scmp.eq.s32.totalorder %s26, 1
        // Predicated region
        $region57: #{tpu_custom_call.1} parent=39 // pred_check
          %p538 = pneg %p537
        $region58: #{tpu_custom_call.1} parent=39 // pred_check_branch
          %540 = sbr.rel (%p538) target = $region60
        $region59: #{tpu_custom_call.1} parent=39 // pred_region
          %v541 = vld [vmem:[#allocation2] sm:$0xff]
          %v542 = vld [vmem:[#allocation2 + $0x8] sm:$0xff]
          %v543 = vld [vmem:[%s4] sm:$0x1]
          %v545 = vlaneseq
          %v546 = vshrl.u32 %v545, 7
          %v547 = vsub.s32 0, %v546
          %v548 = vrot.slane %v543, %v547
          %v550 = vadd.f32 %v541, %v548
          %v551 = vadd.f32 %v542, %v548
          %552 = vst [vmem:[#allocation9] sm:$0xff] %v550
          %553 = vst [vmem:[#allocation9 + $0x8] sm:$0xff] %v551
        $region60: #{tpu_custom_call.1} parent=39 // pred_fallthru
          _
        // Predicated region
        $region61: #{tpu_custom_call.1} parent=39 // pred_check
          %p554 = pneg %p176
        $region62: #{tpu_custom_call.1} parent=39 // pred_check_branch
          %556 = sbr.rel (%p554) target = $region64
        $region63: #{tpu_custom_call.1} parent=39 // pred_region
          %s557 = smul.u32 2, %s25
          %s559 = ssub.s32 256, 256
          %560 = vsyncadd [#allocation5], %s559
          %s561 = smul.addr %s557, 128
          %s562 = scalar_lea.hbm %s5, %s561
          %s563 = sshll.u32 [#allocation9], 4
          %s564 = int_to_ptr.vmem [resolvable:$true] %s563
          %569 = dma.vmem_to_hbm [thread:$0]  %s564, 256, %s562, [#allocation5], 128, 128, 8
        $region64: #{tpu_custom_call.1} parent=39 // pred_fallthru
          _
        // Predicated region
        $region65: #{tpu_custom_call.1} parent=39 // pred_check
          %p570 = pneg %p176
        $region66: #{tpu_custom_call.1} parent=39 // pred_check_branch
          %572 = sbr.rel (%p570) target = $region68
        $region67: #{tpu_custom_call.1} parent=39 // pred_region
          %573 = dma.done [#allocation5], 256
        $region68: #{tpu_custom_call.1} parent=39 // pred_fallthru
          _
      $region40: #{tpu_custom_call.1} parent=5 // pred_fallthru
        _
      %p574 = scmp.le.s32.totalorder 2, %s16
      // Predicated region
      $region69: #{tpu_custom_call.1} parent=5 // pred_check
        %p575 = pneg %p574
      $region70: #{tpu_custom_call.1} parent=5 // pred_check_branch
        %577 = sbr.rel (%p575) target = $region72
      $region71: #{tpu_custom_call.1} parent=5 // pred_region
        %s578 = ssub.s32 %s16, 2
      $region72: #{tpu_custom_call.1} parent=5 // pred_fallthru
        _
    $region6: #{tpu_custom_call.1} parent=1 // loop_footer
      %s20 = sadd.s32 1, %s16
    $region7: #{tpu_custom_call.1} parent=1 // loop_footer_branch
      %15 = sbr.rel target = $region3
    $region8: #{tpu_custom_call.1} parent=1 // loop_exit
      _
    %579 = vsyncpa [#allocation4], 1
    %s580 = scalar_lea.sflag [#allocation4], 1
    %581 = vsyncpa %s580, 1
    %582 = vsyncpa [#allocation7], 1
    %s583 = scalar_lea.sflag [#allocation7], 1
    %584 = vsyncpa %s583, 1
    %585 = vsyncpa [#allocation5], 1
    %s586 = scalar_lea.sflag [#allocation5], 1
    %587 = vsyncpa %s586, 1

</llo_original>
